<compile_context>
chip_gen: v7x
topology: tpu7x:2x2x1
jax: 0.10.0
libtpu: 0.0.40
codegen_flags: <defaults>
</compile_context>

<pallas_src>
import jax
import jax.numpy as jnp
from jax.experimental import pallas as pl
from jax.experimental.pallas import tpu as pltpu


# --------------------------------------------------------------------------
# Kernel
# --------------------------------------------------------------------------
def _reservoir_kernel(x_ref, spike_ref, w_in_ref, a_ref, bias_ref, o_ref):
    """o = tanh(x @ W_in_scaled + spike @ A_scaled + bias_scaled) for one tile."""
    u = jnp.dot(x_ref[...], w_in_ref[...], preferred_element_type=jnp.float32)
    r = jnp.dot(spike_ref[...], a_ref[...], preferred_element_type=jnp.float32)
    # Elementwise math kept in f32 (v5e VPU/EUP have no bf16).
    o_ref[...] = jnp.tanh(u + r + bias_ref[...]).astype(o_ref.dtype)


# --------------------------------------------------------------------------
# Parameter preparation (done ONCE at init time, not per forward call)
# --------------------------------------------------------------------------
def prepare_reservoir_params(w_in, a, bias, alpha):
    """Fold alpha / (1 - alpha) into the weights/bias and cast weights to bf16."""
    alpha = float(alpha)
    return {
        "w_in_scaled": ((1.0 - alpha) * w_in).astype(jnp.bfloat16),   # (N_in,  N_hid)
        "a_scaled": (alpha * a).astype(jnp.bfloat16),                  # (N_hid, N_hid)
        "bias_scaled": ((1.0 - alpha) * bias).reshape(1, -1).astype(jnp.float32),
    }


# --------------------------------------------------------------------------
# Forward wrapper
# --------------------------------------------------------------------------
def reservoir_forward(x, spike, params, *, tm=None, tn=512, out_dtype=jnp.float32):
    w_in_s = params["w_in_scaled"]      # (N_in,  N_hid) bf16
    a_s = params["a_scaled"]            # (N_hid, N_hid) bf16
    bias_s = params["bias_scaled"]      # (1,     N_hid) f32

    batch = x.shape[0]
    n_in, n_hid = w_in_s.shape
    assert a_s.shape == (n_hid, n_hid)
    assert spike.shape == (batch, n_hid)

    # --- M tiling: prefer ONE i tile so the weights are streamed exactly once.
    if tm is None or batch <= tm:
        tm = batch
    else:
        # bf16 packs 2 rows per sublane -> require 16-aligned tiles when splitting M.
        assert batch % tm == 0 and tm % 16 == 0

    # --- N tiling (multiples of 128 keeps every generation's MXU/lanes dense).
    if n_hid <= tn:
        tn = n_hid
    else:
        assert n_hid % tn == 0 and tn % 128 == 0
    # v7x megacore: guarantee >=2 blocks on a parallel axis when shapes allow,
    # so both TensorCores get work instead of one idling on a (1,1) grid.
    if batch // tm == 1 and n_hid // tn == 1 and n_hid % 256 == 0:
        tn = n_hid // 2

    grid = (batch // tm, n_hid // tn)

    # bf16 matmul operands (exact for binary spikes; fine for reservoir weights).
    x_bf = x.astype(jnp.bfloat16)
    spike_bf = spike.astype(jnp.bfloat16)

    # VMEM budget: double-buffered input/output blocks; keep inside v7x 64 MiB/TC.
    block_bytes = 2 * (
        tm * n_in * 2        # x block
        + tm * n_hid * 2     # spike block
        + n_in * tn * 2      # W_in block
        + n_hid * tn * 2     # A block
        + tn * 4             # bias block
        + tm * tn * 4        # output block
    )
    vmem_limit = min(max(block_bytes + (4 << 20), 16 << 20), 48 << 20)

    return pl.pallas_call(
        _reservoir_kernel,
        out_shape=jax.ShapeDtypeStruct((batch, n_hid), out_dtype),
        grid=grid,
        in_specs=[
            pl.BlockSpec((tm, n_in), lambda i, j: (i, 0)),     # x
            pl.BlockSpec((tm, n_hid), lambda i, j: (i, 0)),    # spike
            pl.BlockSpec((n_in, tn), lambda i, j: (0, j)),     # (1-a) * W_in
            pl.BlockSpec((n_hid, tn), lambda i, j: (0, j)),    # a * A
            pl.BlockSpec((1, tn), lambda i, j: (0, j)),        # (1-a) * bias
        ],
        out_specs=pl.BlockSpec((tm, tn), lambda i, j: (i, j)),
        compiler_params=pltpu.CompilerParams(
            dimension_semantics=("parallel", "parallel"),
            vmem_limit_bytes=vmem_limit,
        ),
    )(x_bf, spike_bf, w_in_s, a_s, bias_s)


# --------------------------------------------------------------------------
# References
# --------------------------------------------------------------------------
def reservoir_reference_original(x, spike, w_in, a, bias, alpha):
    """Original PyTorch op ordering, pure f32."""
    u = x @ w_in
    r = spike @ a
    return jnp.tanh(alpha * r + (1.0 - alpha) * (u + bias[None, :]))


def reservoir_reference_bf16(x, spike, params):
    """Same folded / pre-scaled / bf16-operand math as the kernel (f32 dot)."""
    xf = x.astype(jnp.bfloat16).astype(jnp.float32)
    sf = spike.astype(jnp.bfloat16).astype(jnp.float32)
    pre = (xf @ params["w_in_scaled"].astype(jnp.float32)
           + sf @ params["a_scaled"].astype(jnp.float32)
           + params["bias_scaled"])
    return jnp.tanh(pre)


# --------------------------------------------------------------------------
# Demo / self-test
# --------------------------------------------------------------------------
if __name__ == "__main__":
    # Small shapes consistent with the module's forward.
    batch, N_in, N_hid = 8, 32, 128
    Win, b_range, alpha = 1.0, 0.1, 0.5

    key = jax.random.PRNGKey(0)
    k_x, k_spk, k_win, k_a, k_b = jax.random.split(key, 5)

    # Inputs
    x = jax.random.normal(k_x, (batch, N_in), dtype=jnp.float32)
    spike = (jax.random.uniform(k_spk, (batch, N_hid)) > 0.5).astype(jnp.float32)

    # Parameters (synthetic init mirroring torchUniform / A_cluster)
    W_in = jax.random.uniform(
        k_win, (N_in, N_hid), minval=-Win, maxval=Win, dtype=jnp.float32
    )
    A_dense = jax.random.uniform(
        k_a, (N_hid, N_hid), minval=-1.0, maxval=1.0, dtype=jnp.float32
    )
    A_mask = (
        jax.random.uniform(jax.random.fold_in(k_a, 1), (N_hid, N_hid)) < 0.2
    ).astype(jnp.float32)
    A = 0.9 * A_dense * A_mask / jnp.sqrt(0.2 * N_hid)
    bias = jax.random.uniform(
        k_b, (N_hid,), minval=-b_range, maxval=b_range, dtype=jnp.float32
    )

    # One-time parameter preparation (fold alpha into weights/bias, cast to bf16).
    params = prepare_reservoir_params(W_in, A, bias, alpha)

    # Kernel
    y = reservoir_forward(x, spike, params)
    y = jax.block_until_ready(y)

    # Check 1: same folded bf16-operand math, f32 dot (tight tolerance).
    y_bf16_ref = reservoir_reference_bf16(x, spike, params)
    # Check 2: original-op-order f32 reference (documents that the algebraic
    # folding + bf16 operands preserve the module's forward semantics).
    y_orig_ref = reservoir_reference_original(x, spike, W_in, A, bias, alpha)

    assert y.shape == (batch, N_hid)
    assert jnp.allclose(y, y_bf16_ref, atol=2e-3, rtol=2e-3), \
        "mismatch vs folded bf16 reference"
    assert jnp.allclose(y, y_orig_ref, atol=5e-2, rtol=5e-2), \
        "mismatch vs original-order f32 reference"

    print("KERNEL_OK")
</pallas_src>

<mosaic_0001>
module attributes {stable_mosaic.version = 11 : i64} {
  func.func @_reservoir_kernel(%arg0: i32, %arg1: i32, %arg2: memref<8x32xbf16, #tpu.memory_space<vmem>>, %arg3: memref<8x128xbf16, #tpu.memory_space<vmem>>, %arg4: memref<32x128xbf16, #tpu.memory_space<vmem>>, %arg5: memref<128x128xbf16, #tpu.memory_space<vmem>>, %arg6: memref<1x128xf32, #tpu.memory_space<vmem>>, %arg7: memref<8x128xf32, #tpu.memory_space<vmem>>) attributes {dimension_semantics = [#tpu.dimension_semantics<parallel>, #tpu.dimension_semantics<parallel>], iteration_bounds = array<i64: 1, 1>, scalar_prefetch = 0 : i64, scratch_operands = 0 : i64, tpu.core_type = #tpu.core_type<tc>, window_params = [{transform_indices = @transform_0, window_bounds = array<i64: 8, 32>}, {transform_indices = @transform_1, window_bounds = array<i64: 8, 128>}, {transform_indices = @transform_2, window_bounds = array<i64: 32, 128>}, {transform_indices = @transform_3, window_bounds = array<i64: 128, 128>}, {transform_indices = @transform_4, window_bounds = array<i64: 1, 128>}, {transform_indices = @transform_5, window_bounds = array<i64: 8, 128>}]} {
    %c0 = arith.constant 0 : index
    %c0_0 = arith.constant 0 : index
    %0 = vector.load %arg2[%c0, %c0_0] : memref<8x32xbf16, #tpu.memory_space<vmem>>, vector<8x32xbf16>
    %c0_1 = arith.constant 0 : index
    %c0_2 = arith.constant 0 : index
    %1 = vector.load %arg4[%c0_1, %c0_2] : memref<32x128xbf16, #tpu.memory_space<vmem>>, vector<32x128xbf16>
    %cst = arith.constant dense<0.000000e+00> : vector<8x128xf32>
    %2 = tpu.matmul %0, %1, %cst {dimension_numbers = #tpu.dot_dimension_numbers<[1], [0], [0], [1], [0, 0, 1, 1], [], []>} : vector<8x32xbf16>, vector<32x128xbf16>, vector<8x128xf32> -> vector<8x128xf32>
    %c0_3 = arith.constant 0 : index
    %c0_4 = arith.constant 0 : index
    %3 = vector.load %arg3[%c0_3, %c0_4] : memref<8x128xbf16, #tpu.memory_space<vmem>>, vector<8x128xbf16>
    %c0_5 = arith.constant 0 : index
    %c0_6 = arith.constant 0 : index
    %4 = vector.load %arg5[%c0_5, %c0_6] : memref<128x128xbf16, #tpu.memory_space<vmem>>, vector<128x128xbf16>
    %cst_7 = arith.constant dense<0.000000e+00> : vector<8x128xf32>
    %5 = tpu.matmul %3, %4, %cst_7 {dimension_numbers = #tpu.dot_dimension_numbers<[1], [0], [0], [1], [0, 0, 1, 1], [], []>} : vector<8x128xbf16>, vector<128x128xbf16>, vector<8x128xf32> -> vector<8x128xf32>
    %6 = arith.addf %2, %5 : vector<8x128xf32>
    %c0_8 = arith.constant 0 : index
    %c0_9 = arith.constant 0 : index
    %7 = vector.load %arg6[%c0_8, %c0_9] : memref<1x128xf32, #tpu.memory_space<vmem>>, vector<1x128xf32>
    %8 = vector.broadcast %7 : vector<1x128xf32> to vector<8x128xf32>
    %9 = arith.addf %6, %8 : vector<8x128xf32>
    %10 = math.tanh %9 : vector<8x128xf32>
    %c0_10 = arith.constant 0 : index
    %c0_11 = arith.constant 0 : index
    %11 = vector.load %arg7[%c0_10, %c0_11] : memref<8x128xf32, #tpu.memory_space<vmem>>, vector<8x128xf32>
    tpu.vector_store %arg7[%c0_10, %c0_11], %10 {strides = array<i32>} : memref<8x128xf32, #tpu.memory_space<vmem>>, vector<8x128xf32>,
    return
  }
  func.func @transform_0(%arg0: i32, %arg1: i32) -> (i32, i32) {
    %c0_i32 = arith.constant 0 : i32
    %c0_i32_0 = arith.constant 0 : i32
    return %arg0, %c0_i32 : i32, i32
  }
  func.func @transform_1(%arg0: i32, %arg1: i32) -> (i32, i32) {
    %c0_i32 = arith.constant 0 : i32
    %c0_i32_0 = arith.constant 0 : i32
    return %arg0, %c0_i32 : i32, i32
  }
  func.func @transform_2(%arg0: i32, %arg1: i32) -> (i32, i32) {
    %c0_i32 = arith.constant 0 : i32
    %c0_i32_0 = arith.constant 0 : i32
    return %c0_i32, %arg1 : i32, i32
  }
  func.func @transform_3(%arg0: i32, %arg1: i32) -> (i32, i32) {
    %c0_i32 = arith.constant 0 : i32
    %c0_i32_0 = arith.constant 0 : i32
    return %c0_i32, %arg1 : i32, i32
  }
  func.func @transform_4(%arg0: i32, %arg1: i32) -> (i32, i32) {
    %c0_i32 = arith.constant 0 : i32
    %c0_i32_0 = arith.constant 0 : i32
    return %c0_i32, %arg1 : i32, i32
  }
  func.func @transform_5(%arg0: i32, %arg1: i32) -> (i32, i32) {
    %c0_i32 = arith.constant 0 : i32
    return %arg0, %arg1 : i32, i32
  }
}

</mosaic_0001>

<llo_original>
// kernel: tpu_custom_call.1
$region0: #{tpu_custom_call.1}
  #allocation0 [shape = 'u32[]', space=smem, size = 0x4, offset = 0x4, fixed_abs, tag = 'smem constant byte address 0x4 - core index']
  #allocation1 [shape = 'u32[144,128]{1,0:T(1,128)}', space=vmem, size = 0x12000, scoped, tag = 'internal scratch']
  %s0 = inlined_call_operand.hbm [shape: bf16[8,32], index: 0, kind: input, shape index: {}]
  %s1 = inlined_call_operand.hbm [shape: bf16[8,128], index: 1, kind: input, shape index: {}]
  %s2 = inlined_call_operand.hbm [shape: bf16[32,128], index: 2, kind: input, shape index: {}]
  %s3 = inlined_call_operand.hbm [shape: bf16[128,128], index: 3, kind: input, shape index: {}]
  %s4 = inlined_call_operand.vmem [shape: f32[1,128], index: 4, kind: input, shape index: {}]
  %s5 = inlined_call_operand.hbm [shape: f32[8,128], index: 5, kind: output, shape index: {}]
  %s6 = sld [smem:[#allocation0]]
  $region46: #{tpu_custom_call.1} parent=0
    _
  %s8 = ssub.s32 1, %s6
  %s9 = scalar_select 0, %s8, %s6
  $region1: #{tpu_custom_call.1} parent=0
    #allocation2 [shape = 'u8[2048]{0}', space=vmem, size = 0x800, scoped, tag = 'input window, operand 0, single buffered']
    #allocation3 [shape = 's32[1]{0}', space=sflag, size = 0x4, scoped, tag = 'scoped memory for tpu_custom_call.1']
    #allocation4 [shape = 's32[1]{0}', space=sflag, size = 0x4, scoped, tag = 'scoped memory for tpu_custom_call.1']
    #allocation5 [shape = 'u8[2048]{0}', space=vmem, size = 0x800, scoped, tag = 'input window, operand 1, single buffered']
    #allocation6 [shape = 's32[1]{0}', space=sflag, size = 0x4, scoped, tag = 'scoped memory for tpu_custom_call.1']
    #allocation7 [shape = 'u8[8192]{0}', space=vmem, size = 0x2000, scoped, tag = 'input window, operand 2, single buffered']
    #allocation8 [shape = 'u8[32768]{0}', space=vmem, size = 0x8000, scoped, tag = 'input window, operand 3, single buffered']
    #allocation9 [shape = 's32[1]{0}', space=sflag, size = 0x4, scoped, tag = 'scoped memory for tpu_custom_call.1']
    #allocation10 [shape = 'u8[4096]{0}', space=vmem, size = 0x1000, scoped, tag = 'output window, operand 0, single buffered']
    %10 = vsyncpa [#allocation3], 0
    %11 = vsyncpa [#allocation6], 0
    %12 = vsyncpa [#allocation9], 0
    %13 = vsyncpa [#allocation4], 0
    // Predicated region
    $region2: #{tpu_custom_call.1} parent=1 // pred_check
      _
    $region3: #{tpu_custom_call.1} parent=1 // pred_check_branch
      %15 = sbr.rel (0) target = $region5
    $region4: #{tpu_custom_call.1} parent=1 // pred_region
      %s17 = ssub.s32 64, 64
      %18 = vsyncadd [#allocation3], %s17
      %s20 = sshll.u32 [#allocation2], 4
      %s21 = int_to_ptr.vmem [resolvable:$true] %s20
      %23 = dma.hbm_to_vmem [thread:$0]  %s0, 64, %s21, [#allocation3]
    $region5: #{tpu_custom_call.1} parent=1 // pred_fallthru
      _
    // Predicated region
    $region6: #{tpu_custom_call.1} parent=1 // pred_check
      _
    $region7: #{tpu_custom_call.1} parent=1 // pred_check_branch
      %25 = sbr.rel (0) target = $region9
    $region8: #{tpu_custom_call.1} parent=1 // pred_region
      %s27 = ssub.s32 64, 64
      %28 = vsyncadd [#allocation6], %s27
      %s30 = sshll.u32 [#allocation5], 4
      %s31 = int_to_ptr.vmem [resolvable:$true] %s30
      %33 = dma.hbm_to_vmem [thread:$0]  %s1, 64, %s31, [#allocation6]
    $region9: #{tpu_custom_call.1} parent=1 // pred_fallthru
      _
    // Predicated region
    $region10: #{tpu_custom_call.1} parent=1 // pred_check
      _
    $region11: #{tpu_custom_call.1} parent=1 // pred_check_branch
      %35 = sbr.rel (0) target = $region13
    $region12: #{tpu_custom_call.1} parent=1 // pred_region
      %s37 = ssub.s32 256, 256
      %38 = vsyncadd [#allocation6], %s37
      %s39 = sshll.u32 [#allocation7], 4
      %s40 = int_to_ptr.vmem [resolvable:$true] %s39
      %45 = dma.hbm_to_vmem [thread:$0]  %s2, 256, %s40, [#allocation6], 64, 64, 4
    $region13: #{tpu_custom_call.1} parent=1 // pred_fallthru
      _
    // Predicated region
    $region14: #{tpu_custom_call.1} parent=1 // pred_check
      _
    $region15: #{tpu_custom_call.1} parent=1 // pred_check_branch
      %47 = sbr.rel (0) target = $region17
    $region16: #{tpu_custom_call.1} parent=1 // pred_region
      %s49 = ssub.s32 1024, 1024
      %50 = vsyncadd [#allocation9], %s49
      %s51 = sshll.u32 [#allocation8], 4
      %s52 = int_to_ptr.vmem [resolvable:$true] %s51
      %57 = dma.hbm_to_vmem [thread:$0]  %s3, 1024, %s52, [#allocation9], 64, 64, 4
    $region17: #{tpu_custom_call.1} parent=1 // pred_fallthru
      _
    // Predicated region
    $region18: #{tpu_custom_call.1} parent=1 // pred_check
      _
    $region19: #{tpu_custom_call.1} parent=1 // pred_check_branch
      %59 = sbr.rel (0) target = $region21
    $region20: #{tpu_custom_call.1} parent=1 // pred_region
      _
    $region21: #{tpu_custom_call.1} parent=1 // pred_fallthru
      _
    // Predicated region
    $region22: #{tpu_custom_call.1} parent=1 // pred_check
      _
    $region23: #{tpu_custom_call.1} parent=1 // pred_check_branch
      %61 = sbr.rel (0) target = $region25
    $region24: #{tpu_custom_call.1} parent=1 // pred_region
      %62 = dma.done [#allocation3], 64
    $region25: #{tpu_custom_call.1} parent=1 // pred_fallthru
      _
    // Predicated region
    $region26: #{tpu_custom_call.1} parent=1 // pred_check
      _
    $region27: #{tpu_custom_call.1} parent=1 // pred_check_branch
      %64 = sbr.rel (0) target = $region29
    $region28: #{tpu_custom_call.1} parent=1 // pred_region
      %65 = dma.done [#allocation6], 64
    $region29: #{tpu_custom_call.1} parent=1 // pred_fallthru
      _
    // Predicated region
    $region30: #{tpu_custom_call.1} parent=1 // pred_check
      _
    $region31: #{tpu_custom_call.1} parent=1 // pred_check_branch
      %67 = sbr.rel (0) target = $region33
    $region32: #{tpu_custom_call.1} parent=1 // pred_region
      %68 = dma.done [#allocation6], 256
    $region33: #{tpu_custom_call.1} parent=1 // pred_fallthru
      _
    // Predicated region
    $region34: #{tpu_custom_call.1} parent=1 // pred_check
      _
    $region35: #{tpu_custom_call.1} parent=1 // pred_check_branch
      %70 = sbr.rel (0) target = $region37
    $region36: #{tpu_custom_call.1} parent=1 // pred_region
      %71 = dma.done [#allocation9], 1024
    $region37: #{tpu_custom_call.1} parent=1 // pred_fallthru
      _
    %v73 = vld [vmem:[#allocation2] sm:$0xf]
    %v74 = vld [vmem:[#allocation7] sm:$0xf]
    %v75 = vld [vmem:[#allocation7 + $0x4] sm:$0xf]
    %v76 = vld [vmem:[#allocation7 + $0x8] sm:$0xf]
    %v77 = vld [vmem:[#allocation7 + $0xc] sm:$0xf]
    %v78 = vld [vmem:[#allocation5] sm:$0xf]
    %v79 = vld [vmem:[#allocation8] sm:$0xf]
    %v80 = vld [vmem:[#allocation8 + $0x4] sm:$0xf]
    %v81 = vld [vmem:[#allocation8 + $0x8] sm:$0xf]
    %v82 = vld [vmem:[#allocation8 + $0xc] sm:$0xf]
    %v83 = vld [vmem:[#allocation8 + $0x10] sm:$0xf]
    %v84 = vld [vmem:[#allocation8 + $0x14] sm:$0xf]
    %v85 = vld [vmem:[#allocation8 + $0x18] sm:$0xf]
    %v86 = vld [vmem:[#allocation8 + $0x1c] sm:$0xf]
    %v87 = vld [vmem:[#allocation8 + $0x20] sm:$0xf]
    %v88 = vld [vmem:[#allocation8 + $0x24] sm:$0xf]
    %v89 = vld [vmem:[#allocation8 + $0x28] sm:$0xf]
    %v90 = vld [vmem:[#allocation8 + $0x2c] sm:$0xf]
    %v91 = vld [vmem:[#allocation8 + $0x30] sm:$0xf]
    %v92 = vld [vmem:[#allocation8 + $0x34] sm:$0xf]
    %v93 = vld [vmem:[#allocation8 + $0x38] sm:$0xf]
    %v94 = vld [vmem:[#allocation8 + $0x3c] sm:$0xf]
    %v111 = vunpack.c.l.b16 %v79
    %v112 = vunpack.c.l.b16 %v80
    %v113 = vunpack.c.l.b16 %v81
    %v114 = vunpack.c.l.b16 %v82
    %v115 = vunpack.c.l.b16 %v83
    %v116 = vunpack.c.l.b16 %v84
    %v117 = vunpack.c.l.b16 %v85
    %v118 = vunpack.c.l.b16 %v86
    %v119 = vunpack.c.l.b16 %v87
    %v120 = vunpack.c.l.b16 %v88
    %v121 = vunpack.c.l.b16 %v89
    %v122 = vunpack.c.l.b16 %v90
    %v123 = vunpack.c.l.b16 %v91
    %v124 = vunpack.c.l.b16 %v92
    %v125 = vunpack.c.l.b16 %v93
    %v126 = vunpack.c.l.b16 %v94
    %v127 = vpack.c.b16 %v112, %v111
    %v128 = vpack.c.b16 %v114, %v113
    %v129 = vpack.c.b16 %v116, %v115
    %v130 = vpack.c.b16 %v118, %v117
    %v131 = vpack.c.b16 %v120, %v119
    %v132 = vpack.c.b16 %v122, %v121
    %v133 = vpack.c.b16 %v124, %v123
    %v134 = vpack.c.b16 %v126, %v125
    %143 = vmatprep.subr.bf16.mxu0 0
    %144 = vmatpush1.bf16.msra.mxu0 %v127
    %145 = vmatprep.subr.bf16.mxu0 0
    %146 = vmatpush1.bf16.msra.mxu0 %v128
    %147 = vmatprep.subr.bf16.mxu0 0
    %148 = vmatpush1.bf16.msra.mxu0 %v129
    %149 = vmatprep.subr.bf16.mxu0 0
    %150 = vmatpush1.bf16.msra.mxu0 %v130
    %151 = vmatprep.subr.bf16.mxu0 0
    %152 = vmatpush1.bf16.msra.mxu0 %v131
    %153 = vmatprep.subr.bf16.mxu0 0
    %154 = vmatpush1.bf16.msra.mxu0 %v132
    %155 = vmatprep.subr.bf16.mxu0 0
    %156 = vmatpush1.bf16.msra.mxu0 %v133
    %157 = vmatprep.subr.bf16.mxu0 0
    %158 = vmatpush1.bf16.msra.mxu0 %v134
    %159 = vmatprep.subr.bf16.mxu0 0
    %160 = vmatpush1.bf16.msra.mxu0 0
    %161 = vmatprep.subr.bf16.mxu0 0
    %162 = vmatpush1.bf16.msra.mxu0 0
    %163 = vmatprep.subr.bf16.mxu0 0
    %164 = vmatpush1.bf16.msra.mxu0 0
    %165 = vmatprep.subr.bf16.mxu0 0
    %166 = vmatpush1.bf16.msra.mxu0 0
    %167 = vmatprep.subr.bf16.mxu0 0
    %168 = vmatpush1.bf16.msra.mxu0 0
    %169 = vmatprep.subr.bf16.mxu0 0
    %170 = vmatpush1.bf16.msra.mxu0 0
    %171 = vmatprep.subr.bf16.mxu0 0
    %172 = vmatpush1.bf16.msra.mxu0 0
    %173 = vmatprep.subr.bf16.mxu0 0
    %174 = vmatpush1.bf16.msra.mxu0 0
    %175 = vmatprep.mubr.bf16.mxu0 0
    %176 = vmatmul.mubr.bf16.gmra.mrb[0].mxu0 %v78
    %v177 = vpop.f32.mrb[0].mxu0
    %v178 = vadd.f32 0.0, %v177
    %v179 = vpop.f32.mrb[0].mxu0
    %v180 = vpop.f32.mrb[0].mxu0
    %v181 = vpop.f32.mrb[0].mxu0
    %182 = vdwg.mxu0
    %v187 = vunpack.c.l.b16 %v74
    %v188 = vunpack.c.l.b16 %v75
    %v189 = vunpack.c.l.b16 %v76
    %v190 = vunpack.c.l.b16 %v77
    %v191 = vpack.c.b16 %v188, %v187
    %v192 = vpack.c.b16 %v190, %v189
    %vm195 = vcmask 261120
    %v197 = vsel %vm195, %v73, 0
    %199 = vmatprep.subr.bf16.mxu0 0
    %200 = vmatpush1.bf16.msra.mxu0 %v191
    %201 = vmatprep.subr.bf16.mxu0 0
    %202 = vmatpush1.bf16.msra.mxu0 %v192
    %203 = vmatprep.subr.bf16.mxu0 0
    %204 = vmatpush1.bf16.msra.mxu0 0
    %205 = vmatprep.subr.bf16.mxu0 0
    %206 = vmatpush1.bf16.msra.mxu0 0
    %207 = vmatprep.subr.bf16.mxu0 0
    %208 = vmatpush1.bf16.msra.mxu0 0
    %209 = vmatprep.subr.bf16.mxu0 0
    %210 = vmatpush1.bf16.msra.mxu0 0
    %211 = vmatprep.subr.bf16.mxu0 0
    %212 = vmatpush1.bf16.msra.mxu0 0
    %213 = vmatprep.subr.bf16.mxu0 0
    %214 = vmatpush1.bf16.msra.mxu0 0
    %215 = vmatprep.subr.bf16.mxu0 0
    %216 = vmatpush1.bf16.msra.mxu0 0
    %217 = vmatprep.subr.bf16.mxu0 0
    %218 = vmatpush1.bf16.msra.mxu0 0
    %219 = vmatprep.subr.bf16.mxu0 0
    %220 = vmatpush1.bf16.msra.mxu0 0
    %221 = vmatprep.subr.bf16.mxu0 0
    %222 = vmatpush1.bf16.msra.mxu0 0
    %223 = vmatprep.subr.bf16.mxu0 0
    %224 = vmatpush1.bf16.msra.mxu0 0
    %225 = vmatprep.subr.bf16.mxu0 0
    %226 = vmatpush1.bf16.msra.mxu0 0
    %227 = vmatprep.subr.bf16.mxu0 0
    %228 = vmatpush1.bf16.msra.mxu0 0
    %229 = vmatprep.subr.bf16.mxu0 0
    %230 = vmatpush1.bf16.msra.mxu0 0
    %231 = vmatprep.mubr.bf16.mxu0 0
    %232 = vmatmul.mubr.bf16.gmra.mrb[0].mxu0 %v197
    %v233 = vpop.f32.mrb[0].mxu0
    %v234 = vadd.f32 %v178, %v233
    %v235 = vpop.f32.mrb[0].mxu0
    %v236 = vpop.f32.mrb[0].mxu0
    %v237 = vpop.f32.mrb[0].mxu0
    %238 = vdwg.mxu0
    %v239 = vld [vmem:[%s4] sm:$0x1]
    %v241 = vlaneseq
    %v242 = vshrl.u32 %v241, 7
    %v243 = vsub.s32 0, %v242
    %v244 = vrot.slane %v239, %v243
    %v246 = vadd.f32 %v234, %v244
    %v247 = vtanh.pop %v246
    %248 = vst [vmem:[#allocation10] sm:$0xff] %v247
    // Predicated region
    $region38: #{tpu_custom_call.1} parent=1 // pred_check
      _
    $region39: #{tpu_custom_call.1} parent=1 // pred_check_branch
      %250 = sbr.rel (0) target = $region41
    $region40: #{tpu_custom_call.1} parent=1 // pred_region
      %s252 = ssub.s32 128, 128
      %253 = vsyncadd [#allocation4], %s252
      %s255 = sshll.u32 [#allocation10], 4
      %s256 = int_to_ptr.vmem [resolvable:$true] %s255
      %258 = dma.vmem_to_hbm [thread:$0]  %s256, 128, %s5, [#allocation4]
    $region41: #{tpu_custom_call.1} parent=1 // pred_fallthru
      _
    // Predicated region
    $region42: #{tpu_custom_call.1} parent=1 // pred_check
      _
    $region43: #{tpu_custom_call.1} parent=1 // pred_check_branch
      %260 = sbr.rel (0) target = $region45
    $region44: #{tpu_custom_call.1} parent=1 // pred_region
      %261 = dma.done [#allocation4], 128
    $region45: #{tpu_custom_call.1} parent=1 // pred_fallthru
      _
    %262 = vsyncpa [#allocation3], 1
    %263 = vsyncpa [#allocation6], 1
    %264 = vsyncpa [#allocation9], 1
    %265 = vsyncpa [#allocation4], 1

</llo_original>
